<compile_context>
chip_gen: v5e
topology: v5e:2x2
jax: 0.10.0
libtpu: 0.0.40
codegen_flags: <defaults>
</compile_context>

<pallas_src>
import jax
import jax.numpy as jnp
from jax.experimental import pallas as pl
from jax.experimental.pallas import tpu as pltpu


def _round_up(v, m):
    return ((v + m - 1) // m) * m


def _graph_signature_kernel(
    mask_ref,    # (1, TM)       f32   mean weights: 1/N for real rows, 0 for pad
    adj_ref,     # (TM, N_pad)   bf16  row tile of normalized adjacency
    x_ref,       # (N_pad, Cin)  bf16  node features (resident)
    wconv_ref,   # (Cin, C2p)    bf16  GCN weight (resident)
    bconv_ref,   # (1, C2p)      f32   GCN bias (resident)
    whead_ref,   # (C2p, Hp)     f32   fused fc1|fc2|fc3|fc4 weights (resident)
    bhead_ref,   # (1, Hp)       f32   fused biases (resident)
    out_ref,     # (1, Hp)       f32   tanh(heads) output (resident accumulator)
    xw_ref,      # scratch (N_pad, C2p) bf16
    acc_ref,     # scratch (1, C2p)     f32
):
    i = pl.program_id(0)

    # Prologue (first row tile only): XW = X @ W_conv once; zero the accumulator.
    @pl.when(i == 0)
    def _():
        xw = jnp.dot(x_ref[...], wconv_ref[...],
                     preferred_element_type=jnp.float32)
        xw_ref[...] = xw.astype(xw_ref.dtype)
        acc_ref[...] = jnp.zeros_like(acc_ref)

    # h_tile = relu(A_tile @ XW + b_conv)   (MXU bf16 path, f32 accumulate)
    h = jnp.dot(adj_ref[...], xw_ref[...], preferred_element_type=jnp.float32)
    h = jnp.maximum(h + bconv_ref[...], 0.0)

    # Accumulate the node mean via an MXU row-vector matmul; mask already holds
    # the 1/N weights (0 on padded rows) so acc == mean(h, axis=0) at the end.
    acc_ref[...] += jnp.dot(mask_ref[...], h, preferred_element_type=jnp.float32)

    # Epilogue (last row tile): one fused, lane-dense head matmul + tanh.
    @pl.when(i == pl.num_programs(0) - 1)
    def _():
        z = jnp.dot(acc_ref[...], whead_ref[...],
                    preferred_element_type=jnp.float32)
        out_ref[...] = jnp.tanh(z + bhead_ref[...])


def _build_gcn_adjacency(edge_index, num_nodes):
    """Dense symmetric-normalized adjacency with self loops (PyG gcn_norm).

    NOTE: assumes edge_index contains no duplicate edges (scatter-add would
    double-count them, matching torch_scatter only for unique edges).
    """
    n = num_nodes
    row = jnp.concatenate([edge_index[0], jnp.arange(n, dtype=edge_index.dtype)])
    col = jnp.concatenate([edge_index[1], jnp.arange(n, dtype=edge_index.dtype)])
    ew = jnp.ones_like(row, dtype=jnp.float32)
    deg = jnp.zeros((n,), jnp.float32).at[col].add(ew)
    dinv = jnp.where(deg > 0, jax.lax.rsqrt(jnp.maximum(deg, 1e-12)), 0.0)
    norm = dinv[row] * ew * dinv[col]
    # adj[dst, src] so that out = adj @ (x @ W)
    return jnp.zeros((n, n), jnp.float32).at[col, row].add(norm)


def graph_signature_forward(x, edge_index, params, *, row_tile=256):
    """x: (N, Cin) float node features; edge_index: (2, E) int32 src/dst."""
    n, cin = x.shape
    c2 = params["conv1.weight"].shape[1]     # 2 * out_channels
    c = params["fc3.weight"].shape[0]        # out_channels

    # ---- padding / tiling geometry -----------------------------------------
    c2p = _round_up(c2, 128)                 # lane-pad the GCN feature dim
    h_dim = 2 * c2 + 2 * c                   # fused head width (6 * out)
    hp = _round_up(h_dim, 128)               # lane-dense output slab
    if n <= row_tile:
        n_pad = _round_up(n, 8)              # single tile == full array dims
        tm = n_pad
    else:
        tm = row_tile                        # multiple of (8, 128)
        n_pad = _round_up(n, tm)
    num_tiles = n_pad // tm

    # ---- dense normalized adjacency; bf16 halves the dominant HBM traffic ---
    # TODO(synk): for genuinely sparse graphs at large N, replace the dense
    # A_hat with a scalar-prefetch gather/segment-sum kernel (O(E*C) traffic).
    adj = _build_gcn_adjacency(edge_index, n)
    adj = jnp.zeros((n_pad, n_pad), jnp.float32).at[:n, :n].set(adj)
    adj = adj.astype(jnp.bfloat16)

    x_p = jnp.zeros((n_pad, cin), jnp.float32).at[:n, :].set(
        x.astype(jnp.float32)).astype(jnp.bfloat16)

    # Per-row mean weights: 1/N for real nodes, 0 for padded rows.
    mask = jnp.zeros((1, n_pad), jnp.float32).at[0, :n].set(1.0 / n)

    # GCN weight (in, 2C) and bias, zero-padded on the feature axis.
    wconv = jnp.zeros((cin, c2p), jnp.float32).at[:, :c2].set(
        params["conv1.weight"].astype(jnp.float32)).astype(jnp.bfloat16)
    bconv = jnp.zeros((1, c2p), jnp.float32).at[0, :c2].set(
        params["conv1.bias"].astype(jnp.float32))

    # Fused heads: W_all = [W1^T | W2^T | W3^T | W4^T] -> (2C, 6C), lane-padded.
    w_all = jnp.concatenate(
        [params["fc1.weight"].T, params["fc2.weight"].T,
         params["fc3.weight"].T, params["fc4.weight"].T],
        axis=1).astype(jnp.float32)
    b_all = jnp.concatenate(
        [params["fc1.bias"], params["fc2.bias"],
         params["fc3.bias"], params["fc4.bias"]], axis=0).astype(jnp.float32)
    whead = jnp.zeros((c2p, hp), jnp.float32).at[:c2, :h_dim].set(w_all)
    bhead = jnp.zeros((1, hp), jnp.float32).at[0, :h_dim].set(b_all)

    # ---- BlockSpecs ----------------------------------------------------------
    def resident(shape):
        return pl.BlockSpec(shape, lambda i: (0, 0))

    in_specs = [
        pl.BlockSpec((1, tm), lambda i: (0, i)),      # mask (tiled over rows)
        pl.BlockSpec((tm, n_pad), lambda i: (i, 0)),  # adjacency row tile
        resident((n_pad, cin)),                       # x
        resident((cin, c2p)),                         # conv weight
        resident((1, c2p)),                           # conv bias
        resident((c2p, hp)),                          # fused head weight
        resident((1, hp)),                            # fused head bias
    ]
    out_spec = pl.BlockSpec((1, hp), lambda i: (0, 0))

    # VMEM budget: adjacency double-buffer dominates. Size the limit per
    # generation by request (stays well under v7x's 64 MiB physical VMEM).
    vmem_bytes = (2 * tm * n_pad * 2          # adj double buffer (bf16)
                  + n_pad * cin * 2           # x
                  + n_pad * c2p * 2           # XW scratch
                  + cin * c2p * 2             # conv weight
                  + c2p * hp * 4              # fused head weight
                  + (c2p + 2 * hp + 2 * tm + hp) * 4)
    vmem_limit = int(min(48 * 2 ** 20, max(16 * 2 ** 20, 2 * vmem_bytes)))

    cost = pl.CostEstimate(
        flops=int(2 * n_pad * n_pad * c2p          # A @ XW
                  + 2 * n_pad * cin * c2p          # X @ W_conv
                  + 2 * n_pad * c2p                # mean accumulation
                  + 2 * c2p * hp),                 # fused heads
        transcendentals=int(hp),
        bytes_accessed=int(adj.size * 2 + x_p.size * 2
                           + (c2p * hp + hp + c2p) * 4 + hp * 4),
    )

    out = pl.pallas_call(
        _graph_signature_kernel,
        out_shape=jax.ShapeDtypeStruct((1, hp), jnp.float32),
        grid=(num_tiles,),
        in_specs=in_specs,
        out_specs=out_spec,
        scratch_shapes=[
            pltpu.VMEM((n_pad, c2p), jnp.bfloat16),  # XW (resident)
            pltpu.VMEM((1, c2p), jnp.float32),       # mean accumulator
        ],
        compiler_params=pltpu.CompilerParams(
            dimension_semantics=("arbitrary",),      # accumulated row-tile axis
            vmem_limit_bytes=vmem_limit,
        ),
        cost_estimate=cost,
    )(mask, adj, x_p, wconv, bconv, whead, bhead)

    out = out[0]
    g1 = out[:c2]
    b1 = out[c2:2 * c2]
    g2 = out[2 * c2:2 * c2 + c]
    b2 = out[2 * c2 + c:2 * c2 + 2 * c]
    return g1, b1, g2, b2


def _reference_forward(x, edge_index, params):
    """Pure-JAX f32 reference mirroring the PyTorch forward."""
    n = x.shape[0]
    adj = _build_gcn_adjacency(edge_index, n)
    h = jax.nn.relu(adj @ (x.astype(jnp.float32) @ params["conv1.weight"])
                    + params["conv1.bias"])
    m = h.mean(axis=0)
    g1 = jnp.tanh(m @ params["fc1.weight"].T + params["fc1.bias"])
    b1 = jnp.tanh(m @ params["fc2.weight"].T + params["fc2.bias"])
    g2 = jnp.tanh(m @ params["fc3.weight"].T + params["fc3.bias"])
    b2 = jnp.tanh(m @ params["fc4.weight"].T + params["fc4.bias"])
    return g1, b1, g2, b2


def init_params(key, in_channels, out_channels):
    two_c = 2 * out_channels
    keys = jax.random.split(key, 12)

    def u(k, shape, fan_in):
        bound = 1.0 / jnp.sqrt(jnp.float32(fan_in))
        return jax.random.uniform(k, shape, jnp.float32, -bound, bound)

    return {
        "conv1.weight": u(keys[0], (in_channels, two_c), in_channels),
        "conv1.bias":   u(keys[1], (two_c,), in_channels),
        "fc1.weight":   u(keys[2], (two_c, two_c), two_c),
        "fc1.bias":     u(keys[3], (two_c,), two_c),
        "fc2.weight":   u(keys[4], (two_c, two_c), two_c),
        "fc2.bias":     u(keys[5], (two_c,), two_c),
        "fc3.weight":   u(keys[6], (out_channels, two_c), two_c),
        "fc3.bias":     u(keys[7], (out_channels,), two_c),
        "fc4.weight":   u(keys[8], (out_channels, two_c), two_c),
        "fc4.bias":     u(keys[9], (out_channels,), two_c),
        # class_weight exists in __init__ but is unused in forward.
    }


def _ring_edge_index(n):
    src = jnp.arange(n, dtype=jnp.int32)
    dst = (src + 1) % n
    return jnp.stack(
        [jnp.concatenate([src, dst]), jnp.concatenate([dst, src])], axis=0)


if __name__ == "__main__":
    key = jax.random.PRNGKey(0)
    IN_C, OUT_C = 4, 32
    k_x, k_x2, k_p = jax.random.split(key, 3)
    params = init_params(k_p, IN_C, OUT_C)

    # ---- case 1: tiny graph (single row tile) -------------------------------
    N1 = 8
    x1 = jax.random.normal(k_x, (N1, IN_C), jnp.float32)
    ei1 = _ring_edge_index(N1)
    outs1 = jax.block_until_ready(graph_signature_forward(x1, ei1, params))
    refs1 = _reference_forward(x1, ei1, params)

    assert outs1[0].shape == (2 * OUT_C,)
    assert outs1[1].shape == (2 * OUT_C,)
    assert outs1[2].shape == (OUT_C,)
    assert outs1[3].shape == (OUT_C,)
    for o, r in zip(outs1, refs1):
        assert float(jnp.max(jnp.abs(o - r))) < 5e-2

    # ---- case 2: larger graph exercising the multi-tile accumulation path ---
    N2 = 300
    x2 = jax.random.normal(k_x2, (N2, IN_C), jnp.float32)
    ei2 = _ring_edge_index(N2)
    outs2 = jax.block_until_ready(
        graph_signature_forward(x2, ei2, params, row_tile=128))
    refs2 = _reference_forward(x2, ei2, params)
    for o, r in zip(outs2, refs2):
        assert float(jnp.max(jnp.abs(o - r))) < 5e-2

    print("KERNEL_OK")
</pallas_src>

<mosaic_0001>
module attributes {stable_mosaic.version = 11 : i64} {
  func.func @_graph_signature_kernel(%arg0: i32, %arg1: memref<1x8xf32, #tpu.memory_space<vmem>>, %arg2: memref<8x8xbf16, #tpu.memory_space<vmem>>, %arg3: memref<8x4xbf16, #tpu.memory_space<vmem>>, %arg4: memref<4x128xbf16, #tpu.memory_space<vmem>>, %arg5: memref<1x128xf32, #tpu.memory_space<vmem>>, %arg6: memref<128x256xf32, #tpu.memory_space<vmem>>, %arg7: memref<1x256xf32, #tpu.memory_space<vmem>>, %arg8: memref<1x256xf32, #tpu.memory_space<vmem>>, %arg9: memref<8x128xbf16, #tpu.memory_space<vmem>>, %arg10: memref<1x128xf32, #tpu.memory_space<vmem>>) attributes {dimension_semantics = [#tpu.dimension_semantics<arbitrary>], iteration_bounds = array<i64: 1>, scalar_prefetch = 0 : i64, scratch_operands = 2 : i64, tpu.core_type = #tpu.core_type<tc>, window_params = [{transform_indices = @transform_0, window_bounds = array<i64: 1, 8>}, {transform_indices = @transform_1, window_bounds = array<i64: 8, 8>}, {pipeline_mode = #tpu.pipeline_mode<synchronous>, transform_indices = @transform_2, window_bounds = array<i64: 8, 4>}, {pipeline_mode = #tpu.pipeline_mode<synchronous>, transform_indices = @transform_3, window_bounds = array<i64: 4, 128>}, {pipeline_mode = #tpu.pipeline_mode<synchronous>, transform_indices = @transform_4, window_bounds = array<i64: 1, 128>}, {pipeline_mode = #tpu.pipeline_mode<synchronous>, transform_indices = @transform_5, window_bounds = array<i64: 128, 256>}, {pipeline_mode = #tpu.pipeline_mode<synchronous>, transform_indices = @transform_6, window_bounds = array<i64: 1, 256>}, {pipeline_mode = #tpu.pipeline_mode<synchronous>, transform_indices = @transform_7, window_bounds = array<i64: 1, 256>}]} {
    %c0_i32 = arith.constant 0 : i32
    %0 = arith.cmpi eq, %arg0, %c0_i32 : i32
    %1 = arith.extui %0 : i1 to i32
    %c0_i32_0 = arith.constant 0 : i32
    %2 = arith.cmpi ne, %1, %c0_i32_0 : i32
    scf.if %2 {
      %c0_16 = arith.constant 0 : index
      %c0_17 = arith.constant 0 : index
      %19 = vector.load %arg3[%c0_16, %c0_17] : memref<8x4xbf16, #tpu.memory_space<vmem>>, vector<8x4xbf16>
      %c0_18 = arith.constant 0 : index
      %c0_19 = arith.constant 0 : index
      %20 = vector.load %arg4[%c0_18, %c0_19] : memref<4x128xbf16, #tpu.memory_space<vmem>>, vector<4x128xbf16>
      %cst_20 = arith.constant dense<0.000000e+00> : vector<8x128xf32>
      %21 = tpu.matmul %19, %20, %cst_20 {dimension_numbers = #tpu.dot_dimension_numbers<[1], [0], [0], [1], [0, 0, 1, 1], [], []>} : vector<8x4xbf16>, vector<4x128xbf16>, vector<8x128xf32> -> vector<8x128xf32>
      %22 = arith.truncf %21 : vector<8x128xf32> to vector<8x128xbf16>
      %c0_21 = arith.constant 0 : index
      %c0_22 = arith.constant 0 : index
      %23 = vector.load %arg9[%c0_21, %c0_22] : memref<8x128xbf16, #tpu.memory_space<vmem>>, vector<8x128xbf16>
      tpu.vector_store %arg9[%c0_21, %c0_22], %22 {strides = array<i32>} : memref<8x128xbf16, #tpu.memory_space<vmem>>, vector<8x128xbf16>,
      %cst_23 = arith.constant 0.000000e+00 : f32
      %24 = vector.broadcast %cst_23 : f32 to vector<1x128xf32>
      %c0_24 = arith.constant 0 : index
      %c0_25 = arith.constant 0 : index
      %25 = vector.load %arg10[%c0_24, %c0_25] : memref<1x128xf32, #tpu.memory_space<vmem>>, vector<1x128xf32>
      tpu.vector_store %arg10[%c0_24, %c0_25], %24 {strides = array<i32>} : memref<1x128xf32, #tpu.memory_space<vmem>>, vector<1x128xf32>,
    } else {
    }
    %c0 = arith.constant 0 : index
    %c0_1 = arith.constant 0 : index
    %3 = vector.load %arg2[%c0, %c0_1] : memref<8x8xbf16, #tpu.memory_space<vmem>>, vector<8x8xbf16>
    %c0_2 = arith.constant 0 : index
    %c0_3 = arith.constant 0 : index
    %4 = vector.load %arg9[%c0_2, %c0_3] : memref<8x128xbf16, #tpu.memory_space<vmem>>, vector<8x128xbf16>
    %cst = arith.constant dense<0.000000e+00> : vector<8x128xf32>
    %5 = tpu.matmul %3, %4, %cst {dimension_numbers = #tpu.dot_dimension_numbers<[1], [0], [0], [1], [0, 0, 1, 1], [], []>} : vector<8x8xbf16>, vector<8x128xbf16>, vector<8x128xf32> -> vector<8x128xf32>
    %c0_4 = arith.constant 0 : index
    %c0_5 = arith.constant 0 : index
    %6 = vector.load %arg5[%c0_4, %c0_5] : memref<1x128xf32, #tpu.memory_space<vmem>>, vector<1x128xf32>
    %7 = vector.broadcast %6 : vector<1x128xf32> to vector<8x128xf32>
    %8 = arith.addf %5, %7 : vector<8x128xf32>
    %cst_6 = arith.constant 0.000000e+00 : f32
    %9 = vector.broadcast %cst_6 : f32 to vector<8x128xf32>
    %10 = arith.maximumf %8, %9 : vector<8x128xf32>
    %c0_7 = arith.constant 0 : index
    %c0_8 = arith.constant 0 : index
    %11 = vector.load %arg10[%c0_7, %c0_8] : memref<1x128xf32, #tpu.memory_space<vmem>>, vector<1x128xf32>
    %c0_9 = arith.constant 0 : index
    %c0_10 = arith.constant 0 : index
    %12 = vector.load %arg1[%c0_9, %c0_10] : memref<1x8xf32, #tpu.memory_space<vmem>>, vector<1x8xf32>
    %cst_11 = arith.constant dense<0.000000e+00> : vector<1x128xf32>
    %13 = tpu.matmul %12, %10, %cst_11 {dimension_numbers = #tpu.dot_dimension_numbers<[1], [0], [0], [1], [0, 0, 1, 1], [], []>} : vector<1x8xf32>, vector<8x128xf32>, vector<1x128xf32> -> vector<1x128xf32>
    %14 = arith.addf %11, %13 : vector<1x128xf32>
    %c0_12 = arith.constant 0 : index
    %c0_13 = arith.constant 0 : index
    %15 = vector.load %arg10[%c0_12, %c0_13] : memref<1x128xf32, #tpu.memory_space<vmem>>, vector<1x128xf32>
    tpu.vector_store %arg10[%c0_12, %c0_13], %14 {strides = array<i32>} : memref<1x128xf32, #tpu.memory_space<vmem>>, vector<1x128xf32>,
    %c0_i32_14 = arith.constant 0 : i32
    %16 = arith.cmpi eq, %arg0, %c0_i32_14 : i32
    %17 = arith.extui %16 : i1 to i32
    %c0_i32_15 = arith.constant 0 : i32
    %18 = arith.cmpi ne, %17, %c0_i32_15 : i32
    scf.if %18 {
      %c0_16 = arith.constant 0 : index
      %c0_17 = arith.constant 0 : index
      %19 = vector.load %arg10[%c0_16, %c0_17] : memref<1x128xf32, #tpu.memory_space<vmem>>, vector<1x128xf32>
      %c0_18 = arith.constant 0 : index
      %c0_19 = arith.constant 0 : index
      %20 = vector.load %arg6[%c0_18, %c0_19] : memref<128x256xf32, #tpu.memory_space<vmem>>, vector<128x256xf32>
      %cst_20 = arith.constant dense<0.000000e+00> : vector<1x256xf32>
      %21 = tpu.matmul %19, %20, %cst_20 {dimension_numbers = #tpu.dot_dimension_numbers<[1], [0], [0], [1], [0, 0, 1, 1], [], []>} : vector<1x128xf32>, vector<128x256xf32>, vector<1x256xf32> -> vector<1x256xf32>
      %c0_21 = arith.constant 0 : index
      %c0_22 = arith.constant 0 : index
      %22 = vector.load %arg7[%c0_21, %c0_22] : memref<1x256xf32, #tpu.memory_space<vmem>>, vector<1x256xf32>
      %23 = arith.addf %21, %22 : vector<1x256xf32>
      %24 = math.tanh %23 : vector<1x256xf32>
      %c0_23 = arith.constant 0 : index
      %c0_24 = arith.constant 0 : index
      %25 = vector.load %arg8[%c0_23, %c0_24] : memref<1x256xf32, #tpu.memory_space<vmem>>, vector<1x256xf32>
      tpu.vector_store %arg8[%c0_23, %c0_24], %24 {strides = array<i32>} : memref<1x256xf32, #tpu.memory_space<vmem>>, vector<1x256xf32>,
    } else {
    }
    return
  }
  func.func @transform_0(%arg0: i32) -> (i32, i32) {
    %c0_i32 = arith.constant 0 : i32
    %c0_i32_0 = arith.constant 0 : i32
    return %c0_i32, %arg0 : i32, i32
  }
  func.func @transform_1(%arg0: i32) -> (i32, i32) {
    %c0_i32 = arith.constant 0 : i32
    %c0_i32_0 = arith.constant 0 : i32
    return %arg0, %c0_i32 : i32, i32
  }
  func.func @transform_2(%arg0: i32) -> (i32, i32) {
    %c0_i32 = arith.constant 0 : i32
    %c0_i32_0 = arith.constant 0 : i32
    %c0_i32_1 = arith.constant 0 : i32
    return %c0_i32, %c0_i32_0 : i32, i32
  }
  func.func @transform_3(%arg0: i32) -> (i32, i32) {
    %c0_i32 = arith.constant 0 : i32
    %c0_i32_0 = arith.constant 0 : i32
    %c0_i32_1 = arith.constant 0 : i32
    return %c0_i32, %c0_i32_0 : i32, i32
  }
  func.func @transform_4(%arg0: i32) -> (i32, i32) {
    %c0_i32 = arith.constant 0 : i32
    %c0_i32_0 = arith.constant 0 : i32
    %c0_i32_1 = arith.constant 0 : i32
    return %c0_i32, %c0_i32_0 : i32, i32
  }
  func.func @transform_5(%arg0: i32) -> (i32, i32) {
    %c0_i32 = arith.constant 0 : i32
    %c0_i32_0 = arith.constant 0 : i32
    %c0_i32_1 = arith.constant 0 : i32
    return %c0_i32, %c0_i32_0 : i32, i32
  }
  func.func @transform_6(%arg0: i32) -> (i32, i32) {
    %c0_i32 = arith.constant 0 : i32
    %c0_i32_0 = arith.constant 0 : i32
    %c0_i32_1 = arith.constant 0 : i32
    return %c0_i32, %c0_i32_0 : i32, i32
  }
  func.func @transform_7(%arg0: i32) -> (i32, i32) {
    %c0_i32 = arith.constant 0 : i32
    %c0_i32_0 = arith.constant 0 : i32
    %c0_i32_1 = arith.constant 0 : i32
    return %c0_i32, %c0_i32_0 : i32, i32
  }
}

</mosaic_0001>

<llo_original>
// kernel: tpu_custom_call.1
$region0: #{tpu_custom_call.1}
  #allocation0 [shape = 'u32[]', space=smem, size = 0x4, offset = 0x4, fixed_abs, tag = 'smem constant byte address 0x4 - core index']
  #allocation1 [shape = 'u32[72,128]{1,0:T(1,128)}', space=vmem, size = 0x9000, scoped, tag = 'internal scratch']
  #allocation2 [shape = 'bf16[8,128]{1,0:T(8,128)(2,1)}', space=vmem, size = 0x800, scoped, tag = 'scratch operand']
  #allocation3 [shape = 'f32[1,128]{1,0:T(1,128)}', space=vmem, size = 0x200, scoped, tag = 'scratch operand']
  %s0 = inlined_call_operand.hbm [shape: f32[1,8], index: 0, kind: input, shape index: {}]
  %s1 = inlined_call_operand.vmem [shape: bf16[8,8], index: 1, kind: input, shape index: {}]
  %s2 = inlined_call_operand.vmem [shape: bf16[8,4], index: 2, kind: input, shape index: {}]
  %s3 = inlined_call_operand.vmem [shape: bf16[4,128], index: 3, kind: input, shape index: {}]
  %s4 = inlined_call_operand.vmem [shape: f32[1,128], index: 4, kind: input, shape index: {}]
  %s5 = inlined_call_operand.hbm [shape: f32[128,256], index: 5, kind: input, shape index: {}]
  %s6 = inlined_call_operand.vmem [shape: f32[1,256], index: 6, kind: input, shape index: {}]
  %s7 = inlined_call_operand.hbm [shape: f32[1,256], index: 7, kind: output, shape index: {}]
  %s8 = sld [smem:[#allocation0]]
  $region54: #{tpu_custom_call.1} parent=0
    _
  %s10 = ssub.s32 1, %s8
  %s11 = scalar_select 0, %s10, %s8
  $region1: #{tpu_custom_call.1} parent=0
    #allocation4 [shape = 'u8[512]{0}', space=vmem, size = 0x400, scoped, tag = 'input window, operand 0, single buffered']
    #allocation5 [shape = 's32[1]{0}', space=sflag, size = 0x4, scoped, tag = 'scoped memory for tpu_custom_call.1']
    #allocation6 [shape = 's32[1]{0}', space=sflag, size = 0x4, scoped, tag = 'scoped memory for tpu_custom_call.1']
    #allocation7 [shape = 'u8[131072]{0}', space=vmem, size = 0x20000, scoped, tag = 'input window, operand 5, single buffered']
    #allocation8 [shape = 's32[1]{0}', space=sflag, size = 0x4, scoped, tag = 'scoped memory for tpu_custom_call.1']
    #allocation9 [shape = 'u8[1024]{0}', space=vmem, size = 0x400, scoped, tag = 'output window, operand 0, single buffered']
    %12 = vsyncpa [#allocation5], 0
    %13 = vsyncpa [#allocation8], 0
    %14 = vsyncpa [#allocation6], 0
    // Predicated region
    $region2: #{tpu_custom_call.1} parent=1 // pred_check
      _
    $region3: #{tpu_custom_call.1} parent=1 // pred_check_branch
      %16 = sbr.rel (0) target = $region5
    $region4: #{tpu_custom_call.1} parent=1 // pred_region
      %18 = vsyncadd [#allocation5], 0
      %s20 = sshll.u32 %s0, 4
      %s21 = int_to_ptr.hbm [resolvable:$true] %s20
      %s22 = sshll.u32 [#allocation4], 4
      %s23 = int_to_ptr.vmem [resolvable:$true] %s22
      %25 = dma.hbm_to_vmem [thread:$0]  %s21, 16, %s23, [#allocation5]
    $region5: #{tpu_custom_call.1} parent=1 // pred_fallthru
      _
    // Predicated region
    $region6: #{tpu_custom_call.1} parent=1 // pred_check
      _
    $region7: #{tpu_custom_call.1} parent=1 // pred_check_branch
      %27 = sbr.rel (0) target = $region9
    $region8: #{tpu_custom_call.1} parent=1 // pred_region
      _
    $region9: #{tpu_custom_call.1} parent=1 // pred_fallthru
      _
    // Predicated region
    $region10: #{tpu_custom_call.1} parent=1 // pred_check
      _
    $region11: #{tpu_custom_call.1} parent=1 // pred_check_branch
      %29 = sbr.rel (0) target = $region13
    $region12: #{tpu_custom_call.1} parent=1 // pred_region
      _
    $region13: #{tpu_custom_call.1} parent=1 // pred_fallthru
      _
    // Predicated region
    $region14: #{tpu_custom_call.1} parent=1 // pred_check
      _
    $region15: #{tpu_custom_call.1} parent=1 // pred_check_branch
      %31 = sbr.rel (0) target = $region17
    $region16: #{tpu_custom_call.1} parent=1 // pred_region
      _
    $region17: #{tpu_custom_call.1} parent=1 // pred_fallthru
      _
    // Predicated region
    $region18: #{tpu_custom_call.1} parent=1 // pred_check
      _
    $region19: #{tpu_custom_call.1} parent=1 // pred_check_branch
      %33 = sbr.rel (0) target = $region21
    $region20: #{tpu_custom_call.1} parent=1 // pred_region
      _
    $region21: #{tpu_custom_call.1} parent=1 // pred_fallthru
      _
    // Predicated region
    $region22: #{tpu_custom_call.1} parent=1 // pred_check
      _
    $region23: #{tpu_custom_call.1} parent=1 // pred_check_branch
      %35 = sbr.rel (0) target = $region25
    $region24: #{tpu_custom_call.1} parent=1 // pred_region
      %37 = vsyncadd [#allocation8], 0
      %s38 = sshll.u32 %s5, 4
      %s39 = int_to_ptr.hbm [resolvable:$true] %s38
      %s40 = sshll.u32 [#allocation7], 4
      %s41 = int_to_ptr.vmem [resolvable:$true] %s40
      %46 = dma.hbm_to_vmem [thread:$0]  %s39, 4096, %s41, [#allocation8], 256, 256, 16
    $region25: #{tpu_custom_call.1} parent=1 // pred_fallthru
      _
    // Predicated region
    $region26: #{tpu_custom_call.1} parent=1 // pred_check
      _
    $region27: #{tpu_custom_call.1} parent=1 // pred_check_branch
      %48 = sbr.rel (0) target = $region29
    $region28: #{tpu_custom_call.1} parent=1 // pred_region
      _
    $region29: #{tpu_custom_call.1} parent=1 // pred_fallthru
      _
    // Predicated region
    $region30: #{tpu_custom_call.1} parent=1 // pred_check
      _
    $region31: #{tpu_custom_call.1} parent=1 // pred_check_branch
      %50 = sbr.rel (0) target = $region33
    $region32: #{tpu_custom_call.1} parent=1 // pred_region
      %52 = dma.done [#allocation5], 16
    $region33: #{tpu_custom_call.1} parent=1 // pred_fallthru
      _
    // Predicated region
    $region34: #{tpu_custom_call.1} parent=1 // pred_check
      _
    $region35: #{tpu_custom_call.1} parent=1 // pred_check_branch
      %54 = sbr.rel (0) target = $region37
    $region36: #{tpu_custom_call.1} parent=1 // pred_region
      %56 = dma.done [#allocation8], 4096
    $region37: #{tpu_custom_call.1} parent=1 // pred_fallthru
      _
    %p58 = scmp.eq.s32.totalorder 0, 0
    // Predicated region
    $region38: #{tpu_custom_call.1} parent=1 // pred_check
      %p59 = pneg %p58
    $region39: #{tpu_custom_call.1} parent=1 // pred_check_branch
      %61 = sbr.rel (%p59) target = $region41
    $region40: #{tpu_custom_call.1} parent=1 // pred_region
      %v62 = vld [vmem:[%s2] sm:$0xf]
      %v63 = vld [vmem:[%s3] sm:$0x3]
      %vm64 = vcmask 31744
      %v66 = vsel %vm64, %v62, 0
      %vm68 = vcmask 1041408
      %v70 = vsel %vm68, %v63, 0
      %72 = vmatpush.bf16.msra.mxu0 0
      %73 = vmatpush.bf16.msra.mxu0 0
      %74 = vmatpush.bf16.msra.mxu0 0
      %75 = vmatpush.bf16.msra.mxu0 0
      %76 = vmatpush.bf16.msra.mxu0 0
      %77 = vmatpush.bf16.msra.mxu0 0
      %78 = vmatpush.bf16.msra.mxu0 0
      %79 = vmatpush.bf16.msra.mxu0 %v70
      %80 = vmatmul.bf16.gmra.mxu0 %v66
      %v81 = vpop.f32.mrf.mxu0
      %v82 = vadd.f32 0.0, %v81
      %v83 = vpop.f32.mrf.mxu0
      %84 = vdwg.mxu0
      %v85 = vpack.c.bf16 %v82, %v82
      %86 = vst [vmem:[#allocation2] sm:$0xf] %v85
      %87 = vst [vmem:[#allocation3] sm:$0x1] 0.0
    $region41: #{tpu_custom_call.1} parent=1 // pred_fallthru
      _
    %v88 = vld [vmem:[%s1] sm:$0xf]
    %v89 = vld [vmem:[#allocation2] sm:$0xf]
    %v90 = vld [vmem:[%s4] sm:$0x1]
    %v92 = vperm.slane %v90, 0
    %vm94 = vcmask 64512
    %v96 = vsel %vm94, %v88, 0
    %vm98 = vcmask 1043456
    %v100 = vsel %vm98, %v89, 0
    %102 = vmatpush.bf16.msra.mxu0 0
    %103 = vmatpush.bf16.msra.mxu0 0
    %104 = vmatpush.bf16.msra.mxu0 0
    %105 = vmatpush.bf16.msra.mxu0 0
    %106 = vmatpush.bf16.msra.mxu0 0
    %107 = vmatpush.bf16.msra.mxu0 0
    %108 = vmatpush.bf16.msra.mxu0 0
    %109 = vmatpush.bf16.msra.mxu0 %v100
    %110 = vmatmul.bf16.gmra.mxu0 %v96
    %v111 = vpop.f32.mrf.mxu0
    %v112 = vadd.f32 %v92, %v111
    %v113 = vpop.f32.mrf.mxu0
    %114 = vdwg.mxu0
    %v115 = vmax.f32 %v112, 0.0
    %v116 = vld [vmem:[#allocation3] sm:$0x1]
    %v117 = vld [vmem:[#allocation4] sm:$0x1]
    %v119 = vsel %vm94, %v117, 0
    %121 = vmatpush.msra.mxu0 0.0
    %122 = vmatpush.msra.mxu0 0.0
    %123 = vmatpush.msra.mxu0 0.0
    %124 = vmatpush.msra.mxu0 0.0
    %125 = vmatpush.msra.mxu0 0.0
    %126 = vmatpush.msra.mxu0 0.0
    %127 = vmatpush.msra.mxu0 0.0
    %128 = vmatpush.msra.mxu0 0.0
    %129 = vmatpush.msra.mxu0 0.0
    %130 = vmatpush.msra.mxu0 0.0
    %131 = vmatpush.msra.mxu0 0.0
    %132 = vmatpush.msra.mxu0 0.0
    %133 = vmatpush.msra.mxu0 0.0
    %134 = vmatpush.msra.mxu0 0.0
    %135 = vmatpush.msra.mxu0 0.0
    %136 = vmatpush.msra.mxu0 %v115
    %137 = vmatmul.f32.gmra.mxu0 %v119
    %v138 = vpop.f32.mrf.mxu0
    %v139 = vadd.f32 0.0, %v138
    %140 = vdwg.mxu0
    %v141 = vadd.f32 %v116, %v139
    %142 = vst [vmem:[#allocation3] sm:$0x1] %v141
    // Predicated region
    $region42: #{tpu_custom_call.1} parent=1 // pred_check
      %p143 = pneg %p58
    $region43: #{tpu_custom_call.1} parent=1 // pred_check_branch
      %145 = sbr.rel (%p143) target = $region45
    $region44: #{tpu_custom_call.1} parent=1 // pred_region
      %v146 = vld [vmem:[#allocation3] sm:$0x1]
      %v147 = vld [vmem:[#allocation7] sm:$0xff]
      %v148 = vld [vmem:[#allocation7 + $0x8] sm:$0xff]
      %v149 = vld [vmem:[#allocation7 + $0x10] sm:$0xff]
      %v150 = vld [vmem:[#allocation7 + $0x18] sm:$0xff]
      %v151 = vld [vmem:[#allocation7 + $0x20] sm:$0xff]
      %v152 = vld [vmem:[#allocation7 + $0x28] sm:$0xff]
      %v153 = vld [vmem:[#allocation7 + $0x30] sm:$0xff]
      %v154 = vld [vmem:[#allocation7 + $0x38] sm:$0xff]
      %v155 = vld [vmem:[#allocation7 + $0x40] sm:$0xff]
      %v156 = vld [vmem:[#allocation7 + $0x48] sm:$0xff]
      %v157 = vld [vmem:[#allocation7 + $0x50] sm:$0xff]
      %v158 = vld [vmem:[#allocation7 + $0x58] sm:$0xff]
      %v159 = vld [vmem:[#allocation7 + $0x60] sm:$0xff]
      %v160 = vld [vmem:[#allocation7 + $0x68] sm:$0xff]
      %v161 = vld [vmem:[#allocation7 + $0x70] sm:$0xff]
      %v162 = vld [vmem:[#allocation7 + $0x78] sm:$0xff]
      %v163 = vld [vmem:[#allocation7 + $0x80] sm:$0xff]
      %v164 = vld [vmem:[#allocation7 + $0x88] sm:$0xff]
      %v165 = vld [vmem:[#allocation7 + $0x90] sm:$0xff]
      %v166 = vld [vmem:[#allocation7 + $0x98] sm:$0xff]
      %v167 = vld [vmem:[#allocation7 + $0xa0] sm:$0xff]
      %v168 = vld [vmem:[#allocation7 + $0xa8] sm:$0xff]
      %v169 = vld [vmem:[#allocation7 + $0xb0] sm:$0xff]
      %v170 = vld [vmem:[#allocation7 + $0xb8] sm:$0xff]
      %v171 = vld [vmem:[#allocation7 + $0xc0] sm:$0xff]
      %v172 = vld [vmem:[#allocation7 + $0xc8] sm:$0xff]
      %v173 = vld [vmem:[#allocation7 + $0xd0] sm:$0xff]
      %v174 = vld [vmem:[#allocation7 + $0xd8] sm:$0xff]
      %v175 = vld [vmem:[#allocation7 + $0xe0] sm:$0xff]
      %v176 = vld [vmem:[#allocation7 + $0xe8] sm:$0xff]
      %v177 = vld [vmem:[#allocation7 + $0xf0] sm:$0xff]
      %v178 = vld [vmem:[#allocation7 + $0xf8] sm:$0xff]
      %v179 = vld [vmem:[%s6] sm:$0x3]
      %v181 = vperm.slane %v179, 0
      %v182 = vperm.slane %v179, 1
      %185 = vmatpush.msra.mxu0 %v177
      %186 = vmatpush.msra.mxu0 %v175
      %187 = vmatpush.msra.mxu0 %v173
      %188 = vmatpush.msra.mxu0 %v171
      %189 = vmatpush.msra.mxu0 %v169
      %190 = vmatpush.msra.mxu0 %v167
      %191 = vmatpush.msra.mxu0 %v165
      %192 = vmatpush.msra.mxu0 %v163
      %193 = vmatpush.msra.mxu0 %v161
      %194 = vmatpush.msra.mxu0 %v159
      %195 = vmatpush.msra.mxu0 %v157
      %196 = vmatpush.msra.mxu0 %v155
      %197 = vmatpush.msra.mxu0 %v153
      %198 = vmatpush.msra.mxu0 %v151
      %199 = vmatpush.msra.mxu0 %v149
      %200 = vmatpush.msra.mxu0 %v147
      %201 = vmatmul.f32.gmra.mxu0 %v146
      %v202 = vpop.f32.mrf.mxu0
      %v203 = vadd.f32 %v181, %v202
      %204 = vdwg.mxu0
      %205 = vmatpush.msra.mxu0 %v178
      %206 = vmatpush.msra.mxu0 %v176
      %207 = vmatpush.msra.mxu0 %v174
      %208 = vmatpush.msra.mxu0 %v172
      %209 = vmatpush.msra.mxu0 %v170
      %210 = vmatpush.msra.mxu0 %v168
      %211 = vmatpush.msra.mxu0 %v166
      %212 = vmatpush.msra.mxu0 %v164
      %213 = vmatpush.msra.mxu0 %v162
      %214 = vmatpush.msra.mxu0 %v160
      %215 = vmatpush.msra.mxu0 %v158
      %216 = vmatpush.msra.mxu0 %v156
      %217 = vmatpush.msra.mxu0 %v154
      %218 = vmatpush.msra.mxu0 %v152
      %219 = vmatpush.msra.mxu0 %v150
      %220 = vmatpush.msra.mxu0 %v148
      %221 = vmatmul.f32.gmra.mxu0 %v146
      %v222 = vpop.f32.mrf.mxu0
      %v223 = vadd.f32 %v182, %v222
      %224 = vdwg.mxu0
      %v225 = vtanh.pop %v203
      %v226 = vtanh.pop %v223
      %v229 = vrot.slane %v226, 7
      %vm230 = vcmask 1040384
      %v231 = vsel %vm230, %v225, %v229
      %v233 = vlaneseq
      %vm234 = vcmp.ge.s32.totalorder %v233, 0
      %vm235 = vcmp.lt.s32.totalorder %v233, 256
      %vm236 = vmand %vm234, %vm235
      %237 = vst.msk [vmem:[#allocation9] sm:$0x3] %vm236, %v231
    $region45: #{tpu_custom_call.1} parent=1 // pred_fallthru
      _
    // Predicated region
    $region46: #{tpu_custom_call.1} parent=1 // pred_check
      _
    $region47: #{tpu_custom_call.1} parent=1 // pred_check_branch
      %239 = sbr.rel (0) target = $region49
    $region48: #{tpu_custom_call.1} parent=1 // pred_region
      %241 = vsyncadd [#allocation6], 0
      %s243 = sshll.u32 [#allocation9], 4
      %s244 = int_to_ptr.vmem [resolvable:$true] %s243
      %s245 = sshll.u32 %s7, 4
      %s246 = int_to_ptr.hbm [resolvable:$true] %s245
      %248 = dma.vmem_to_hbm [thread:$0]  %s244, 32, %s246, [#allocation6]
    $region49: #{tpu_custom_call.1} parent=1 // pred_fallthru
      _
    // Predicated region
    $region50: #{tpu_custom_call.1} parent=1 // pred_check
      _
    $region51: #{tpu_custom_call.1} parent=1 // pred_check_branch
      %250 = sbr.rel (0) target = $region53
    $region52: #{tpu_custom_call.1} parent=1 // pred_region
      %252 = dma.done [#allocation6], 32
    $region53: #{tpu_custom_call.1} parent=1 // pred_fallthru
      _
    %253 = vsyncpa [#allocation5], 1
    %254 = vsyncpa [#allocation8], 1
    %255 = vsyncpa [#allocation6], 1

</llo_original>
